<compile_context>
chip_gen: v7x
topology: tpu7x:2x2x1
jax: 0.10.0
libtpu: 0.0.40
codegen_flags: <defaults>
</compile_context>

<pallas_src>
import jax
import jax.numpy as jnp
from jax import lax
from jax.experimental import pallas as pl
from jax.experimental.pallas import tpu as pltpu  # noqa: F401  (used on the scale-up path)


def _linear_kernel(x_ref, w_ref, b_ref, o_ref):
    # x_ref: [M, K] f32, w_ref: [N, K] bf16 (lane-dense along K), b_ref: [1, N] f32.
    x_bf16 = x_ref[...].astype(jnp.bfloat16)          # in-kernel VPU cast
    acc = lax.dot_general(
        x_bf16,
        w_ref[...],
        dimension_numbers=(((1,), (1,)), ((), ())),     # contract K on both sides
        preferred_element_type=jnp.float32,             # f32 MXU accumulation
    )
    o_ref[...] = acc + b_ref[...]                       # f32 bias add (v5e-safe)


def linear_pallas(x_flat, w_bf16, bias2d):
    """y = x_flat @ W^T + b in one gridless Pallas call.

    x_flat: [M, K] float32 (cast to bf16 inside the kernel)
    w_bf16: [N, K] bfloat16 (PyTorch [out_features, in_features] layout)
    bias2d: [1, N] float32
    """
    M, K = x_flat.shape
    N, K2 = w_bf16.shape
    assert K == K2

    bytes_accessed = (
        x_flat.size * x_flat.dtype.itemsize
        + w_bf16.size * w_bf16.dtype.itemsize
        + bias2d.size * bias2d.dtype.itemsize
        + M * N * 4
    )

    return pl.pallas_call(
        _linear_kernel,
        out_shape=jax.ShapeDtypeStruct((M, N), jnp.float32),
        in_specs=[
            pl.BlockSpec((M, K), lambda: (0, 0)),   # x, whole array resident in VMEM
            pl.BlockSpec((N, K), lambda: (0, 0)),   # W, lane-dense along K
            pl.BlockSpec((1, N), lambda: (0, 0)),   # bias
        ],
        out_specs=pl.BlockSpec((M, N), lambda: (0, 0)),
        cost_estimate=pl.CostEstimate(
            flops=2 * M * K * N,
            transcendentals=0,
            bytes_accessed=bytes_accessed,
        ),
    )(x_flat, w_bf16, bias2d)


class NetPallas:
    """JAX/Pallas equivalent of the PyTorch Net: Flatten -> Linear."""

    def __init__(self, input_shape, output_shape, key):
        k_w, k_b = jax.random.split(key)
        # Deterministic init mimicking nn.Linear's uniform(-1/sqrt(fan_in), ...).
        bound = 1.0 / jnp.sqrt(jnp.float32(input_shape))
        self.weight = jax.random.uniform(
            k_w, (output_shape, input_shape), jnp.float32, -bound, bound
        )
        self.bias = jax.random.uniform(
            k_b, (output_shape,), jnp.float32, -bound, bound
        )
        # Pre-cast once; keep PyTorch's [out, in] layout (lane-dense K, no transpose).
        self.w_bf16 = self.weight.astype(jnp.bfloat16)   # [N, K]
        self.bias2d = self.bias.reshape(1, -1)            # [1, N]

    def __call__(self, x):
        # Flatten: [B, C, H, W] -> [B, C*H*W]   (plain-JAX glue).
        # NOTE: M=2 pads to 8/16 sublanes; batching B>=16 per call amortizes
        # that filler if the caller controls batching.
        x_flat = x.reshape(x.shape[0], -1)
        return linear_pallas(x_flat, self.w_bf16, self.bias2d)


if __name__ == "__main__":
    key = jax.random.PRNGKey(0)
    k_x, k_p = jax.random.split(key)

    B, C, H, W = 2, 4, 16, 16          # input x: NCHW
    in_features = C * H * W            # 1024
    out_features = 32

    x = jax.random.normal(k_x, (B, C, H, W), dtype=jnp.float32)

    net = NetPallas(in_features, out_features, k_p)
    y = net(x)
    y = jax.block_until_ready(y)
    assert y.shape == (B, out_features)

    # Reference 1: mirror the kernel's bf16-operand / f32-accumulate path.
    x_flat = x.reshape(B, -1)
    y_ref_bf16 = (
        lax.dot_general(
            x_flat.astype(jnp.bfloat16),
            net.w_bf16,
            dimension_numbers=(((1,), (1,)), ((), ())),
            preferred_element_type=jnp.float32,
        )
        + net.bias2d
    )
    assert jnp.allclose(y, y_ref_bf16, atol=1e-3, rtol=1e-3)

    # Reference 2: full f32 PyTorch semantics (loose tolerance for bf16 operands).
    y_ref_f32 = x_flat @ net.weight.T + net.bias
    assert jnp.allclose(y, y_ref_f32, atol=5e-2, rtol=5e-2)

    print("KERNEL_OK")
</pallas_src>

<mosaic_0001>
module attributes {stable_mosaic.version = 11 : i64} {
  func.func @_linear_kernel(%arg0: memref<2x1024xf32, #tpu.memory_space<vmem>>, %arg1: memref<32x1024xbf16, #tpu.memory_space<vmem>>, %arg2: memref<1x32xf32, #tpu.memory_space<vmem>>, %arg3: memref<2x32xf32, #tpu.memory_space<vmem>>) attributes {dimension_semantics = [], scalar_prefetch = 0 : i64, scratch_operands = 0 : i64, tpu.core_type = #tpu.core_type<tc>} {
    %c0 = arith.constant 0 : index
    %c0_0 = arith.constant 0 : index
    %0 = vector.load %arg0[%c0, %c0_0] : memref<2x1024xf32, #tpu.memory_space<vmem>>, vector<2x1024xf32>
    %1 = arith.truncf %0 : vector<2x1024xf32> to vector<2x1024xbf16>
    %c0_1 = arith.constant 0 : index
    %c0_2 = arith.constant 0 : index
    %2 = vector.load %arg1[%c0_1, %c0_2] : memref<32x1024xbf16, #tpu.memory_space<vmem>>, vector<32x1024xbf16>
    %cst = arith.constant dense<0.000000e+00> : vector<2x32xf32>
    %3 = tpu.matmul %1, %2, %cst {dimension_numbers = #tpu.dot_dimension_numbers<[1], [1], [0], [0], [0, 0, 1, 0], [], []>} : vector<2x1024xbf16>, vector<32x1024xbf16>, vector<2x32xf32> -> vector<2x32xf32>
    %c0_3 = arith.constant 0 : index
    %c0_4 = arith.constant 0 : index
    %4 = vector.load %arg2[%c0_3, %c0_4] : memref<1x32xf32, #tpu.memory_space<vmem>>, vector<1x32xf32>
    %5 = vector.broadcast %4 : vector<1x32xf32> to vector<2x32xf32>
    %6 = arith.addf %3, %5 : vector<2x32xf32>
    %c0_5 = arith.constant 0 : index
    %c0_6 = arith.constant 0 : index
    %7 = vector.load %arg3[%c0_5, %c0_6] : memref<2x32xf32, #tpu.memory_space<vmem>>, vector<2x32xf32>
    tpu.vector_store %arg3[%c0_5, %c0_6], %6 {strides = array<i32>} : memref<2x32xf32, #tpu.memory_space<vmem>>, vector<2x32xf32>,
    return
  }
}

</mosaic_0001>

<llo_original>
// kernel: tpu_custom_call.1
$region0: #{tpu_custom_call.1}
  #allocation0 [shape = 'u32[]', space=smem, size = 0x4, offset = 0x4, fixed_abs, tag = 'smem constant byte address 0x4 - core index']
  #allocation1 [shape = 'u32[144,128]{1,0:T(1,128)}', space=vmem, size = 0x12000, scoped, tag = 'internal scratch']
  %s0 = inlined_call_operand.hbm [shape: f32[2,1024], index: 0, kind: input, shape index: {}]
  %s1 = inlined_call_operand.hbm [shape: bf16[32,1024], index: 1, kind: input, shape index: {}]
  %s2 = inlined_call_operand.vmem [shape: f32[1,32], index: 2, kind: input, shape index: {}]
  %s3 = inlined_call_operand.hbm [shape: f32[2,32], index: 3, kind: output, shape index: {}]
  %s4 = sld [smem:[#allocation0]]
  $region30: #{tpu_custom_call.1} parent=0
    _
  %s6 = ssub.s32 1, %s4
  %s7 = scalar_select 0, %s6, %s4
  $region1: #{tpu_custom_call.1} parent=0
    #allocation2 [shape = 'u8[8192]{0}', space=vmem, size = 0x2000, scoped, tag = 'input window, operand 0, single buffered']
    #allocation3 [shape = 's32[1]{0}', space=sflag, size = 0x4, scoped, tag = 'scoped memory for tpu_custom_call.1']
    #allocation4 [shape = 's32[1]{0}', space=sflag, size = 0x4, scoped, tag = 'scoped memory for tpu_custom_call.1']
    #allocation5 [shape = 'u8[65536]{0}', space=vmem, size = 0x10000, scoped, tag = 'input window, operand 1, single buffered']
    #allocation6 [shape = 's32[1]{0}', space=sflag, size = 0x4, scoped, tag = 'scoped memory for tpu_custom_call.1']
    #allocation7 [shape = 'u8[1024]{0}', space=vmem, size = 0x400, scoped, tag = 'output window, operand 0, single buffered']
    %8 = vsyncpa [#allocation3], 0
    %9 = vsyncpa [#allocation6], 0
    %10 = vsyncpa [#allocation4], 0
    // Predicated region
    $region2: #{tpu_custom_call.1} parent=1 // pred_check
      _
    $region3: #{tpu_custom_call.1} parent=1 // pred_check_branch
      %12 = sbr.rel (0) target = $region5
    $region4: #{tpu_custom_call.1} parent=1 // pred_region
      %s14 = ssub.s32 256, 256
      %15 = vsyncadd [#allocation3], %s14
      %s17 = sshll.u32 [#allocation2], 4
      %s18 = int_to_ptr.vmem [resolvable:$true] %s17
      %20 = dma.hbm_to_vmem [thread:$0]  %s0, 256, %s18, [#allocation3]
    $region5: #{tpu_custom_call.1} parent=1 // pred_fallthru
      _
    // Predicated region
    $region6: #{tpu_custom_call.1} parent=1 // pred_check
      _
    $region7: #{tpu_custom_call.1} parent=1 // pred_check_branch
      %22 = sbr.rel (0) target = $region9
    $region8: #{tpu_custom_call.1} parent=1 // pred_region
      %s24 = ssub.s32 2048, 2048
      %25 = vsyncadd [#allocation6], %s24
      %s26 = sshll.u32 [#allocation5], 4
      %s27 = int_to_ptr.vmem [resolvable:$true] %s26
      %32 = dma.hbm_to_vmem [thread:$0]  %s1, 2048, %s27, [#allocation6], 512, 512, 32
    $region9: #{tpu_custom_call.1} parent=1 // pred_fallthru
      _
    // Predicated region
    $region10: #{tpu_custom_call.1} parent=1 // pred_check
      _
    $region11: #{tpu_custom_call.1} parent=1 // pred_check_branch
      %34 = sbr.rel (0) target = $region13
    $region12: #{tpu_custom_call.1} parent=1 // pred_region
      _
    $region13: #{tpu_custom_call.1} parent=1 // pred_fallthru
      _
    // Predicated region
    $region14: #{tpu_custom_call.1} parent=1 // pred_check
      _
    $region15: #{tpu_custom_call.1} parent=1 // pred_check_branch
      %36 = sbr.rel (0) target = $region17
    $region16: #{tpu_custom_call.1} parent=1 // pred_region
      %37 = dma.done [#allocation3], 256
    $region17: #{tpu_custom_call.1} parent=1 // pred_fallthru
      _
    // Predicated region
    $region18: #{tpu_custom_call.1} parent=1 // pred_check
      _
    $region19: #{tpu_custom_call.1} parent=1 // pred_check_branch
      %39 = sbr.rel (0) target = $region21
    $region20: #{tpu_custom_call.1} parent=1 // pred_region
      %40 = dma.done [#allocation6], 2048
    $region21: #{tpu_custom_call.1} parent=1 // pred_fallthru
      _
    %v42 = vld [vmem:[#allocation2] sm:$0xff]
    %v43 = vld [vmem:[#allocation2 + $0x8] sm:$0xff]
    %v46 = vcombine.high %v42, %v42
    %v48 = vunpack.c.l.s4 1983009808
    %v49 = vunpack.c.0.s8 %v48
    %v50 = vlaneseq
    %v51 = vshrl.u32 %v50, 7
    %v52 = vsub.s32 %v49, %v51
    %v53 = vrot.slane %v42, %v52
    %v55 = vunpack.c.l.s4 1983009808
    %v56 = vunpack.c.0.s8 %v55
    %v57 = vlaneseq
    %v58 = vshrl.u32 %v57, 7
    %v59 = vsub.s32 %v56, %v58
    %v60 = vrot.slane %v46, %v59
    %v61 = vcombine.high %v53, %v53
    %v62 = vcombine.high %v60, %v60
    %v63 = vcombine.high %v43, %v43
    %v65 = vunpack.c.l.s4 1983009808
    %v66 = vunpack.c.0.s8 %v65
    %v67 = vlaneseq
    %v68 = vshrl.u32 %v67, 7
    %v69 = vsub.s32 %v66, %v68
    %v70 = vrot.slane %v43, %v69
    %v72 = vunpack.c.l.s4 1983009808
    %v73 = vunpack.c.0.s8 %v72
    %v74 = vlaneseq
    %v75 = vshrl.u32 %v74, 7
    %v76 = vsub.s32 %v73, %v75
    %v77 = vrot.slane %v63, %v76
    %v78 = vcombine.high %v70, %v70
    %v79 = vcombine.high %v77, %v77
    %v88 = vpack.c.bf16 %v53, %v53
    %v89 = vpack.c.bf16 %v61, %v61
    %v90 = vpack.c.bf16 %v60, %v60
    %v91 = vpack.c.bf16 %v62, %v62
    %v92 = vpack.c.bf16 %v70, %v70
    %v93 = vpack.c.bf16 %v78, %v78
    %v94 = vpack.c.bf16 %v77, %v77
    %v95 = vpack.c.bf16 %v79, %v79
    %v96 = vld [vmem:[#allocation5] sm:$0xff]
    %v97 = vld [vmem:[#allocation5 + $0x8] sm:$0xff]
    %v98 = vld [vmem:[#allocation5 + $0x10] sm:$0xff]
    %v99 = vld [vmem:[#allocation5 + $0x18] sm:$0xff]
    %v100 = vld [vmem:[#allocation5 + $0x20] sm:$0xff]
    %v101 = vld [vmem:[#allocation5 + $0x28] sm:$0xff]
    %v102 = vld [vmem:[#allocation5 + $0x30] sm:$0xff]
    %v103 = vld [vmem:[#allocation5 + $0x38] sm:$0xff]
    %v104 = vld [vmem:[#allocation5 + $0x40] sm:$0xff]
    %v105 = vld [vmem:[#allocation5 + $0x48] sm:$0xff]
    %v106 = vld [vmem:[#allocation5 + $0x50] sm:$0xff]
    %v107 = vld [vmem:[#allocation5 + $0x58] sm:$0xff]
    %v108 = vld [vmem:[#allocation5 + $0x60] sm:$0xff]
    %v109 = vld [vmem:[#allocation5 + $0x68] sm:$0xff]
    %v110 = vld [vmem:[#allocation5 + $0x70] sm:$0xff]
    %v111 = vld [vmem:[#allocation5 + $0x78] sm:$0xff]
    %v112 = vld [vmem:[%s2] sm:$0x1]
    %v114 = vlaneseq
    %v115 = vshrl.u32 %v114, 7
    %v116 = vsub.s32 0, %v115
    %v117 = vrot.slane %v112, %v116
    %v135 = vunpack.c.l.b16 %v96
    %v136 = vunpack.c.h.b16 %v96
    %v137 = vunpack.c.l.b16 %v97
    %v138 = vunpack.c.h.b16 %v97
    %v139 = vunpack.c.l.b16 %v98
    %v140 = vunpack.c.h.b16 %v98
    %v141 = vunpack.c.l.b16 %v99
    %v142 = vunpack.c.h.b16 %v99
    %v143 = vunpack.c.l.b16 %v100
    %v144 = vunpack.c.h.b16 %v100
    %v145 = vunpack.c.l.b16 %v101
    %v146 = vunpack.c.h.b16 %v101
    %v147 = vunpack.c.l.b16 %v102
    %v148 = vunpack.c.h.b16 %v102
    %v149 = vunpack.c.l.b16 %v103
    %v150 = vunpack.c.h.b16 %v103
    %v151 = vunpack.c.l.b16 %v104
    %v152 = vunpack.c.h.b16 %v104
    %v153 = vunpack.c.l.b16 %v105
    %v154 = vunpack.c.h.b16 %v105
    %v155 = vunpack.c.l.b16 %v106
    %v156 = vunpack.c.h.b16 %v106
    %v157 = vunpack.c.l.b16 %v107
    %v158 = vunpack.c.h.b16 %v107
    %v159 = vunpack.c.l.b16 %v108
    %v160 = vunpack.c.h.b16 %v108
    %v161 = vunpack.c.l.b16 %v109
    %v162 = vunpack.c.h.b16 %v109
    %v163 = vunpack.c.l.b16 %v110
    %v164 = vunpack.c.h.b16 %v110
    %v165 = vunpack.c.l.b16 %v111
    %v166 = vunpack.c.h.b16 %v111
    %v167 = vpack.c.b16 %v143, %v135
    %v168 = vpack.c.b16 %v144, %v136
    %v169 = vpack.c.b16 %v145, %v137
    %v170 = vpack.c.b16 %v146, %v138
    %v171 = vpack.c.b16 %v147, %v139
    %v172 = vpack.c.b16 %v148, %v140
    %v173 = vpack.c.b16 %v149, %v141
    %v174 = vpack.c.b16 %v150, %v142
    %v175 = vpack.c.b16 %v159, %v151
    %v176 = vpack.c.b16 %v160, %v152
    %v177 = vpack.c.b16 %v161, %v153
    %v178 = vpack.c.b16 %v162, %v154
    %v179 = vpack.c.b16 %v163, %v155
    %v180 = vpack.c.b16 %v164, %v156
    %v181 = vpack.c.b16 %v165, %v157
    %v182 = vpack.c.b16 %v166, %v158
    %199 = vmatprep.subr.bf16.mxu0 %v168
    %200 = vmatpush1.bf16.xpose.msra.mxu0 %v167
    %201 = vmatprep.subr.bf16.mxu0 %v176
    %202 = vmatpush1.bf16.xpose.msra.mxu0 %v175
    %203 = vmatprep.subr.bf16.mxu0 0
    %204 = vmatpush1.bf16.xpose.msra.mxu0 0
    %205 = vmatprep.subr.bf16.mxu0 0
    %206 = vmatpush1.bf16.xpose.msra.mxu0 0
    %207 = vmatprep.subr.bf16.mxu0 0
    %208 = vmatpush1.bf16.xpose.msra.mxu0 0
    %209 = vmatprep.subr.bf16.mxu0 0
    %210 = vmatpush1.bf16.xpose.msra.mxu0 0
    %211 = vmatprep.subr.bf16.mxu0 0
    %212 = vmatpush1.bf16.xpose.msra.mxu0 0
    %213 = vmatprep.subr.bf16.mxu0 0
    %214 = vmatpush1.bf16.xpose.msra.mxu0 0
    %215 = vmatprep.subr.bf16.mxu0 0
    %216 = vmatpush1.bf16.xpose.msra.mxu0 0
    %217 = vmatprep.subr.bf16.mxu0 0
    %218 = vmatpush1.bf16.xpose.msra.mxu0 0
    %219 = vmatprep.subr.bf16.mxu0 0
    %220 = vmatpush1.bf16.xpose.msra.mxu0 0
    %221 = vmatprep.subr.bf16.mxu0 0
    %222 = vmatpush1.bf16.xpose.msra.mxu0 0
    %223 = vmatprep.subr.bf16.mxu0 0
    %224 = vmatpush1.bf16.xpose.msra.mxu0 0
    %225 = vmatprep.subr.bf16.mxu0 0
    %226 = vmatpush1.bf16.xpose.msra.mxu0 0
    %227 = vmatprep.subr.bf16.mxu0 0
    %228 = vmatpush1.bf16.xpose.msra.mxu0 0
    %229 = vmatprep.subr.bf16.mxu0 0
    %230 = vmatpush1.bf16.xpose.msra.mxu0 0
    %231 = vmatprep.mubr.bf16.mxu0 %v89
    %232 = vmatmul.mubr.bf16.gmra.mrb[0].mxu0 %v88
    %v233 = vpop.f32.mrb[0].mxu0
    %v234 = vadd.f32 %v117, %v233
    %v235 = vpop.f32.mrb[0].mxu0
    %v236 = vpop.f32.mrb[0].mxu0
    %v237 = vpop.f32.mrb[0].mxu0
    %238 = vdwg.mxu0
    %239 = vmatprep.subr.bf16.mxu0 %v170
    %240 = vmatpush1.bf16.xpose.msra.mxu0 %v169
    %241 = vmatprep.subr.bf16.mxu0 %v178
    %242 = vmatpush1.bf16.xpose.msra.mxu0 %v177
    %243 = vmatprep.subr.bf16.mxu0 0
    %244 = vmatpush1.bf16.xpose.msra.mxu0 0
    %245 = vmatprep.subr.bf16.mxu0 0
    %246 = vmatpush1.bf16.xpose.msra.mxu0 0
    %247 = vmatprep.subr.bf16.mxu0 0
    %248 = vmatpush1.bf16.xpose.msra.mxu0 0
    %249 = vmatprep.subr.bf16.mxu0 0
    %250 = vmatpush1.bf16.xpose.msra.mxu0 0
    %251 = vmatprep.subr.bf16.mxu0 0
    %252 = vmatpush1.bf16.xpose.msra.mxu0 0
    %253 = vmatprep.subr.bf16.mxu0 0
    %254 = vmatpush1.bf16.xpose.msra.mxu0 0
    %255 = vmatprep.subr.bf16.mxu0 0
    %256 = vmatpush1.bf16.xpose.msra.mxu0 0
    %257 = vmatprep.subr.bf16.mxu0 0
    %258 = vmatpush1.bf16.xpose.msra.mxu0 0
    %259 = vmatprep.subr.bf16.mxu0 0
    %260 = vmatpush1.bf16.xpose.msra.mxu0 0
    %261 = vmatprep.subr.bf16.mxu0 0
    %262 = vmatpush1.bf16.xpose.msra.mxu0 0
    %263 = vmatprep.subr.bf16.mxu0 0
    %264 = vmatpush1.bf16.xpose.msra.mxu0 0
    %265 = vmatprep.subr.bf16.mxu0 0
    %266 = vmatpush1.bf16.xpose.msra.mxu0 0
    %267 = vmatprep.subr.bf16.mxu0 0
    %268 = vmatpush1.bf16.xpose.msra.mxu0 0
    %269 = vmatprep.subr.bf16.mxu0 0
    %270 = vmatpush1.bf16.xpose.msra.mxu0 0
    %271 = vmatprep.mubr.bf16.mxu0 %v91
    %272 = vmatmul.mubr.bf16.gmra.mrb[0].mxu0 %v90
    %v273 = vpop.f32.mrb[0].mxu0
    %v274 = vadd.f32 %v234, %v273
    %v275 = vpop.f32.mrb[0].mxu0
    %v276 = vpop.f32.mrb[0].mxu0
    %v277 = vpop.f32.mrb[0].mxu0
    %278 = vdwg.mxu0
    %279 = vmatprep.subr.bf16.mxu0 %v172
    %280 = vmatpush1.bf16.xpose.msra.mxu0 %v171
    %281 = vmatprep.subr.bf16.mxu0 %v180
    %282 = vmatpush1.bf16.xpose.msra.mxu0 %v179
    %283 = vmatprep.subr.bf16.mxu0 0
    %284 = vmatpush1.bf16.xpose.msra.mxu0 0
    %285 = vmatprep.subr.bf16.mxu0 0
    %286 = vmatpush1.bf16.xpose.msra.mxu0 0
    %287 = vmatprep.subr.bf16.mxu0 0
    %288 = vmatpush1.bf16.xpose.msra.mxu0 0
    %289 = vmatprep.subr.bf16.mxu0 0
    %290 = vmatpush1.bf16.xpose.msra.mxu0 0
    %291 = vmatprep.subr.bf16.mxu0 0
    %292 = vmatpush1.bf16.xpose.msra.mxu0 0
    %293 = vmatprep.subr.bf16.mxu0 0
    %294 = vmatpush1.bf16.xpose.msra.mxu0 0
    %295 = vmatprep.subr.bf16.mxu0 0
    %296 = vmatpush1.bf16.xpose.msra.mxu0 0
    %297 = vmatprep.subr.bf16.mxu0 0
    %298 = vmatpush1.bf16.xpose.msra.mxu0 0
    %299 = vmatprep.subr.bf16.mxu0 0
    %300 = vmatpush1.bf16.xpose.msra.mxu0 0
    %301 = vmatprep.subr.bf16.mxu0 0
    %302 = vmatpush1.bf16.xpose.msra.mxu0 0
    %303 = vmatprep.subr.bf16.mxu0 0
    %304 = vmatpush1.bf16.xpose.msra.mxu0 0
    %305 = vmatprep.subr.bf16.mxu0 0
    %306 = vmatpush1.bf16.xpose.msra.mxu0 0
    %307 = vmatprep.subr.bf16.mxu0 0
    %308 = vmatpush1.bf16.xpose.msra.mxu0 0
    %309 = vmatprep.subr.bf16.mxu0 0
    %310 = vmatpush1.bf16.xpose.msra.mxu0 0
    %311 = vmatprep.mubr.bf16.mxu0 %v93
    %312 = vmatmul.mubr.bf16.gmra.mrb[0].mxu0 %v92
    %v313 = vpop.f32.mrb[0].mxu0
    %v314 = vadd.f32 %v274, %v313
    %v315 = vpop.f32.mrb[0].mxu0
    %v316 = vpop.f32.mrb[0].mxu0
    %v317 = vpop.f32.mrb[0].mxu0
    %318 = vdwg.mxu0
    %319 = vmatprep.subr.bf16.mxu0 %v174
    %320 = vmatpush1.bf16.xpose.msra.mxu0 %v173
    %321 = vmatprep.subr.bf16.mxu0 %v182
    %322 = vmatpush1.bf16.xpose.msra.mxu0 %v181
    %323 = vmatprep.subr.bf16.mxu0 0
    %324 = vmatpush1.bf16.xpose.msra.mxu0 0
    %325 = vmatprep.subr.bf16.mxu0 0
    %326 = vmatpush1.bf16.xpose.msra.mxu0 0
    %327 = vmatprep.subr.bf16.mxu0 0
    %328 = vmatpush1.bf16.xpose.msra.mxu0 0
    %329 = vmatprep.subr.bf16.mxu0 0
    %330 = vmatpush1.bf16.xpose.msra.mxu0 0
    %331 = vmatprep.subr.bf16.mxu0 0
    %332 = vmatpush1.bf16.xpose.msra.mxu0 0
    %333 = vmatprep.subr.bf16.mxu0 0
    %334 = vmatpush1.bf16.xpose.msra.mxu0 0
    %335 = vmatprep.subr.bf16.mxu0 0
    %336 = vmatpush1.bf16.xpose.msra.mxu0 0
    %337 = vmatprep.subr.bf16.mxu0 0
    %338 = vmatpush1.bf16.xpose.msra.mxu0 0
    %339 = vmatprep.subr.bf16.mxu0 0
    %340 = vmatpush1.bf16.xpose.msra.mxu0 0
    %341 = vmatprep.subr.bf16.mxu0 0
    %342 = vmatpush1.bf16.xpose.msra.mxu0 0
    %343 = vmatprep.subr.bf16.mxu0 0
    %344 = vmatpush1.bf16.xpose.msra.mxu0 0
    %345 = vmatprep.subr.bf16.mxu0 0
    %346 = vmatpush1.bf16.xpose.msra.mxu0 0
    %347 = vmatprep.subr.bf16.mxu0 0
    %348 = vmatpush1.bf16.xpose.msra.mxu0 0
    %349 = vmatprep.subr.bf16.mxu0 0
    %350 = vmatpush1.bf16.xpose.msra.mxu0 0
    %351 = vmatprep.mubr.bf16.mxu0 %v95
    %352 = vmatmul.mubr.bf16.gmra.mrb[0].mxu0 %v94
    %v353 = vpop.f32.mrb[0].mxu0
    %v354 = vadd.f32 %v314, %v353
    %v355 = vpop.f32.mrb[0].mxu0
    %v356 = vpop.f32.mrb[0].mxu0
    %v357 = vpop.f32.mrb[0].mxu0
    %358 = vdwg.mxu0
    %vm359 = vcmask 254976
    %360 = vst.msk [vmem:[#allocation7] sm:$0x3] %vm359, %v354
    // Predicated region
    $region22: #{tpu_custom_call.1} parent=1 // pred_check
      _
    $region23: #{tpu_custom_call.1} parent=1 // pred_check_branch
      %362 = sbr.rel (0) target = $region25
    $region24: #{tpu_custom_call.1} parent=1 // pred_region
      %s364 = ssub.s32 32, 32
      %365 = vsyncadd [#allocation4], %s364
      %s367 = sshll.u32 [#allocation7], 4
      %s368 = int_to_ptr.vmem [resolvable:$true] %s367
      %370 = dma.vmem_to_hbm [thread:$0]  %s368, 32, %s3, [#allocation4]
    $region25: #{tpu_custom_call.1} parent=1 // pred_fallthru
      _
    // Predicated region
    $region26: #{tpu_custom_call.1} parent=1 // pred_check
      _
    $region27: #{tpu_custom_call.1} parent=1 // pred_check_branch
      %372 = sbr.rel (0) target = $region29
    $region28: #{tpu_custom_call.1} parent=1 // pred_region
      %373 = dma.done [#allocation4], 32
    $region29: #{tpu_custom_call.1} parent=1 // pred_fallthru
      _
    %374 = vsyncpa [#allocation3], 1
    %375 = vsyncpa [#allocation6], 1
    %376 = vsyncpa [#allocation4], 1

</llo_original>
